<compile_context>
chip_gen: v5e
topology: v5e:2x2
jax: 0.10.0
libtpu: 0.0.40
codegen_flags: <defaults>
</compile_context>

<pallas_src>
import jax
import jax.numpy as jnp
from jax.experimental import pallas as pl
from jax.experimental.pallas import tpu as pltpu

LANE = 128      # vreg lane width
SUBLANE = 8     # f32 sublane count


def _round_up(x, m):
    return (x + m - 1) // m * m


# ----------------------------- Pallas kernel -------------------------------

def _fused_affine_kernel(x_ref, w_ref, o_ref):
    # (tb, D_in_p) @ (D_in_p, D_out_p) — bias already folded into the last
    # "real" contraction row, so this is a pure MXU op + lane-dense store.
    o_ref[...] = jnp.dot(
        x_ref[...], w_ref[...], preferred_element_type=jnp.float32
    ).astype(o_ref.dtype)


def bayesian_regressor_forward(x, w1t, b1, w2t, b2):
    """Forward of BayesianRegressor: blinear2(blinear1(x)), no activation."""
    B, D_in = x.shape
    H = w1t.shape[1]
    D_out = w2t.shape[1]
    assert w1t.shape == (D_in, H)
    assert b1.shape == (1, H)
    assert w2t.shape == (H, D_out)
    assert b2.shape == (1, D_out)

    # No activation between the two layers in the reference module, so they
    # collapse exactly into one affine map (tiny one-time matmul in glue).
    w_eff = w1t @ w2t            # (D_in, D_out)
    b_eff = b1 @ w2t + b2        # (1, D_out)

    # Pad contraction dim to a multiple of 128, reserving one slot for the
    # bias row (augmented-matrix bias fold), and pad the output lane dim to a
    # multiple of 128 for unmasked stores.
    D_in_p = _round_up(D_in + 1, LANE)
    D_out_p = _round_up(D_out, LANE)

    w_aug = jnp.concatenate([w_eff, b_eff], axis=0)          # (D_in+1, D_out)
    w_aug = jnp.pad(
        w_aug, ((0, D_in_p - (D_in + 1)), (0, D_out_p - D_out)))

    # Sublane-align the batch and tile it over a "parallel" grid axis.
    B_p = _round_up(B, SUBLANE)
    tb = min(B_p, 512)           # big tiles: amortize ~0.35us/step overhead
    B_p = _round_up(B_p, tb)

    x_aug = jnp.concatenate([x, jnp.ones((B, 1), x.dtype)], axis=1)
    x_p = jnp.pad(x_aug, ((0, B_p - B), (0, D_in_p - (D_in + 1))))

    out = pl.pallas_call(
        _fused_affine_kernel,
        out_shape=jax.ShapeDtypeStruct((B_p, D_out_p), jnp.float32),
        grid=(B_p // tb,),
        in_specs=[
            pl.BlockSpec((tb, D_in_p), lambda i: (i, 0)),        # x tile
            pl.BlockSpec((D_in_p, D_out_p), lambda i: (0, 0)),   # W (resident)
        ],
        out_specs=pl.BlockSpec((tb, D_out_p), lambda i: (i, 0)),
        compiler_params=pltpu.CompilerParams(
            dimension_semantics=("parallel",),  # shard batch tiles on v7x 2-TC
        ),
    )(x_p, w_aug)

    return out[:B, :D_out]


# ------------------- Bayesian parameter sampling (glue) --------------------

def sample_bayesian_linear(key, in_features, out_features,
                           posterior_mu_init=0.0, posterior_rho_init=-7.0):
    """Mimics blitz BayesianLinear: w = mu + softplus(rho) * eps, eps~N(0,1)."""
    k_wmu, k_wrho, k_weps, k_bmu, k_brho, k_beps = jax.random.split(key, 6)

    w_mu = posterior_mu_init + 0.1 * jax.random.normal(
        k_wmu, (out_features, in_features), jnp.float32)
    w_rho = posterior_rho_init + 0.1 * jax.random.normal(
        k_wrho, (out_features, in_features), jnp.float32)
    w_eps = jax.random.normal(k_weps, (out_features, in_features), jnp.float32)
    w = w_mu + jnp.log1p(jnp.exp(w_rho)) * w_eps          # softplus(rho) * eps

    b_mu = posterior_mu_init + 0.1 * jax.random.normal(
        k_bmu, (out_features,), jnp.float32)
    b_rho = posterior_rho_init + 0.1 * jax.random.normal(
        k_brho, (out_features,), jnp.float32)
    b_eps = jax.random.normal(k_beps, (out_features,), jnp.float32)
    b = b_mu + jnp.log1p(jnp.exp(b_rho)) * b_eps

    # Pre-transpose weight for the kernel: (in, out); bias as (1, out).
    return w.T, b.reshape(1, out_features)


# --------------------------------- main -------------------------------------

if __name__ == "__main__":
    INPUT_DIM = 32
    HIDDEN = 100       # fixed by BayesianRegressor.__init__
    OUTPUT_DIM = 8
    BATCH = 8

    key = jax.random.PRNGKey(0)
    k_x, k_l1, k_l2 = jax.random.split(key, 3)

    x = jax.random.normal(k_x, (BATCH, INPUT_DIM), jnp.float32)
    w1t, b1 = sample_bayesian_linear(k_l1, INPUT_DIM, HIDDEN)
    w2t, b2 = sample_bayesian_linear(k_l2, HIDDEN, OUTPUT_DIM)

    out = bayesian_regressor_forward(x, w1t, b1, w2t, b2)
    out = jax.block_until_ready(out)

    # Sanity check against the un-collapsed two-layer reference forward.
    ref = (x @ w1t + b1) @ w2t + b2
    assert out.shape == (BATCH, OUTPUT_DIM)
    assert jnp.allclose(out, ref, atol=1e-4, rtol=1e-4)

    print("KERNEL_OK")
</pallas_src>

<mosaic_0001>
module attributes {stable_mosaic.version = 11 : i64} {
  func.func @_fused_affine_kernel(%arg0: i32, %arg1: memref<8x128xf32, #tpu.memory_space<vmem>>, %arg2: memref<128x128xf32, #tpu.memory_space<vmem>>, %arg3: memref<8x128xf32, #tpu.memory_space<vmem>>) attributes {dimension_semantics = [#tpu.dimension_semantics<parallel>], iteration_bounds = array<i64: 1>, scalar_prefetch = 0 : i64, scratch_operands = 0 : i64, tpu.core_type = #tpu.core_type<tc>, window_params = [{transform_indices = @transform_0, window_bounds = array<i64: 8, 128>}, {pipeline_mode = #tpu.pipeline_mode<synchronous>, transform_indices = @transform_1, window_bounds = array<i64: 128, 128>}, {transform_indices = @transform_2, window_bounds = array<i64: 8, 128>}]} {
    %c0 = arith.constant 0 : index
    %c0_0 = arith.constant 0 : index
    %0 = vector.load %arg1[%c0, %c0_0] : memref<8x128xf32, #tpu.memory_space<vmem>>, vector<8x128xf32>
    %c0_1 = arith.constant 0 : index
    %c0_2 = arith.constant 0 : index
    %1 = vector.load %arg2[%c0_1, %c0_2] : memref<128x128xf32, #tpu.memory_space<vmem>>, vector<128x128xf32>
    %cst = arith.constant dense<0.000000e+00> : vector<8x128xf32>
    %2 = tpu.matmul %0, %1, %cst {dimension_numbers = #tpu.dot_dimension_numbers<[1], [0], [0], [1], [0, 0, 1, 1], [], []>} : vector<8x128xf32>, vector<128x128xf32>, vector<8x128xf32> -> vector<8x128xf32>
    %c0_3 = arith.constant 0 : index
    %c0_4 = arith.constant 0 : index
    %3 = vector.load %arg3[%c0_3, %c0_4] : memref<8x128xf32, #tpu.memory_space<vmem>>, vector<8x128xf32>
    tpu.vector_store %arg3[%c0_3, %c0_4], %2 {strides = array<i32>} : memref<8x128xf32, #tpu.memory_space<vmem>>, vector<8x128xf32>,
    return
  }
  func.func @transform_0(%arg0: i32) -> (i32, i32) {
    %c0_i32 = arith.constant 0 : i32
    %c0_i32_0 = arith.constant 0 : i32
    return %arg0, %c0_i32 : i32, i32
  }
  func.func @transform_1(%arg0: i32) -> (i32, i32) {
    %c0_i32 = arith.constant 0 : i32
    %c0_i32_0 = arith.constant 0 : i32
    %c0_i32_1 = arith.constant 0 : i32
    return %c0_i32, %c0_i32_0 : i32, i32
  }
  func.func @transform_2(%arg0: i32) -> (i32, i32) {
    %c0_i32 = arith.constant 0 : i32
    %c0_i32_0 = arith.constant 0 : i32
    return %arg0, %c0_i32 : i32, i32
  }
}

</mosaic_0001>

<llo_original>
// kernel: tpu_custom_call.1
$region0: #{tpu_custom_call.1}
  #allocation0 [shape = 'u32[]', space=smem, size = 0x4, offset = 0x4, fixed_abs, tag = 'smem constant byte address 0x4 - core index']
  #allocation1 [shape = 'u32[72,128]{1,0:T(1,128)}', space=vmem, size = 0x9000, scoped, tag = 'internal scratch']
  %s0 = inlined_call_operand.hbm [shape: f32[8,128], index: 0, kind: input, shape index: {}]
  %s1 = inlined_call_operand.hbm [shape: f32[128,128], index: 1, kind: input, shape index: {}]
  %s2 = inlined_call_operand.hbm [shape: f32[8,128], index: 2, kind: output, shape index: {}]
  %s3 = sld [smem:[#allocation0]]
  $region26: #{tpu_custom_call.1} parent=0
    _
  %s5 = ssub.s32 1, %s3
  %s6 = scalar_select 0, %s5, %s3
  $region1: #{tpu_custom_call.1} parent=0
    #allocation2 [shape = 'u8[4096]{0}', space=vmem, size = 0x1000, scoped, tag = 'input window, operand 0, single buffered']
    #allocation3 [shape = 's32[1]{0}', space=sflag, size = 0x4, scoped, tag = 'scoped memory for tpu_custom_call.1']
    #allocation4 [shape = 's32[1]{0}', space=sflag, size = 0x4, scoped, tag = 'scoped memory for tpu_custom_call.1']
    #allocation5 [shape = 'u8[65536]{0}', space=vmem, size = 0x10000, scoped, tag = 'input window, operand 1, single buffered']
    #allocation6 [shape = 's32[1]{0}', space=sflag, size = 0x4, scoped, tag = 'scoped memory for tpu_custom_call.1']
    #allocation7 [shape = 'u8[4096]{0}', space=vmem, size = 0x1000, scoped, tag = 'output window, operand 0, single buffered']
    %7 = vsyncpa [#allocation3], 0
    %8 = vsyncpa [#allocation6], 0
    %9 = vsyncpa [#allocation4], 0
    // Predicated region
    $region2: #{tpu_custom_call.1} parent=1 // pred_check
      _
    $region3: #{tpu_custom_call.1} parent=1 // pred_check_branch
      %11 = sbr.rel (0) target = $region5
    $region4: #{tpu_custom_call.1} parent=1 // pred_region
      %13 = vsyncadd [#allocation3], 0
      %s15 = sshll.u32 %s0, 4
      %s16 = int_to_ptr.hbm [resolvable:$true] %s15
      %s17 = sshll.u32 [#allocation2], 4
      %s18 = int_to_ptr.vmem [resolvable:$true] %s17
      %20 = dma.hbm_to_vmem [thread:$0]  %s16, 128, %s18, [#allocation3]
    $region5: #{tpu_custom_call.1} parent=1 // pred_fallthru
      _
    // Predicated region
    $region6: #{tpu_custom_call.1} parent=1 // pred_check
      _
    $region7: #{tpu_custom_call.1} parent=1 // pred_check_branch
      %22 = sbr.rel (0) target = $region9
    $region8: #{tpu_custom_call.1} parent=1 // pred_region
      %24 = vsyncadd [#allocation6], 0
      %s25 = sshll.u32 %s1, 4
      %s26 = int_to_ptr.hbm [resolvable:$true] %s25
      %s27 = sshll.u32 [#allocation5], 4
      %s28 = int_to_ptr.vmem [resolvable:$true] %s27
      %33 = dma.hbm_to_vmem [thread:$0]  %s26, 2048, %s28, [#allocation6], 128, 128, 8
    $region9: #{tpu_custom_call.1} parent=1 // pred_fallthru
      _
    // Predicated region
    $region10: #{tpu_custom_call.1} parent=1 // pred_check
      _
    $region11: #{tpu_custom_call.1} parent=1 // pred_check_branch
      %35 = sbr.rel (0) target = $region13
    $region12: #{tpu_custom_call.1} parent=1 // pred_region
      %37 = dma.done [#allocation3], 128
    $region13: #{tpu_custom_call.1} parent=1 // pred_fallthru
      _
    // Predicated region
    $region14: #{tpu_custom_call.1} parent=1 // pred_check
      _
    $region15: #{tpu_custom_call.1} parent=1 // pred_check_branch
      %39 = sbr.rel (0) target = $region17
    $region16: #{tpu_custom_call.1} parent=1 // pred_region
      %41 = dma.done [#allocation6], 2048
    $region17: #{tpu_custom_call.1} parent=1 // pred_fallthru
      _
    %v42 = vld [vmem:[#allocation2] sm:$0xff]
    %v43 = vld [vmem:[#allocation5] sm:$0xff]
    %v44 = vld [vmem:[#allocation5 + $0x8] sm:$0xff]
    %v45 = vld [vmem:[#allocation5 + $0x10] sm:$0xff]
    %v46 = vld [vmem:[#allocation5 + $0x18] sm:$0xff]
    %v47 = vld [vmem:[#allocation5 + $0x20] sm:$0xff]
    %v48 = vld [vmem:[#allocation5 + $0x28] sm:$0xff]
    %v49 = vld [vmem:[#allocation5 + $0x30] sm:$0xff]
    %v50 = vld [vmem:[#allocation5 + $0x38] sm:$0xff]
    %v51 = vld [vmem:[#allocation5 + $0x40] sm:$0xff]
    %v52 = vld [vmem:[#allocation5 + $0x48] sm:$0xff]
    %v53 = vld [vmem:[#allocation5 + $0x50] sm:$0xff]
    %v54 = vld [vmem:[#allocation5 + $0x58] sm:$0xff]
    %v55 = vld [vmem:[#allocation5 + $0x60] sm:$0xff]
    %v56 = vld [vmem:[#allocation5 + $0x68] sm:$0xff]
    %v57 = vld [vmem:[#allocation5 + $0x70] sm:$0xff]
    %v58 = vld [vmem:[#allocation5 + $0x78] sm:$0xff]
    %59 = vmatpush.msra.mxu0 %v58
    %60 = vmatpush.msra.mxu0 %v57
    %61 = vmatpush.msra.mxu0 %v56
    %62 = vmatpush.msra.mxu0 %v55
    %63 = vmatpush.msra.mxu0 %v54
    %64 = vmatpush.msra.mxu0 %v53
    %65 = vmatpush.msra.mxu0 %v52
    %66 = vmatpush.msra.mxu0 %v51
    %67 = vmatpush.msra.mxu0 %v50
    %68 = vmatpush.msra.mxu0 %v49
    %69 = vmatpush.msra.mxu0 %v48
    %70 = vmatpush.msra.mxu0 %v47
    %71 = vmatpush.msra.mxu0 %v46
    %72 = vmatpush.msra.mxu0 %v45
    %73 = vmatpush.msra.mxu0 %v44
    %74 = vmatpush.msra.mxu0 %v43
    %75 = vmatmul.f32.gmra.mxu0 %v42
    %v76 = vpop.f32.mrf.mxu0
    %v77 = vadd.f32 0.0, %v76
    %78 = vdwg.mxu0
    %79 = vst [vmem:[#allocation7] sm:$0xff] %v77
    // Predicated region
    $region18: #{tpu_custom_call.1} parent=1 // pred_check
      _
    $region19: #{tpu_custom_call.1} parent=1 // pred_check_branch
      %81 = sbr.rel (0) target = $region21
    $region20: #{tpu_custom_call.1} parent=1 // pred_region
      %83 = vsyncadd [#allocation4], 0
      %s85 = sshll.u32 [#allocation7], 4
      %s86 = int_to_ptr.vmem [resolvable:$true] %s85
      %s87 = sshll.u32 %s2, 4
      %s88 = int_to_ptr.hbm [resolvable:$true] %s87
      %90 = dma.vmem_to_hbm [thread:$0]  %s86, 128, %s88, [#allocation4]
    $region21: #{tpu_custom_call.1} parent=1 // pred_fallthru
      _
    // Predicated region
    $region22: #{tpu_custom_call.1} parent=1 // pred_check
      _
    $region23: #{tpu_custom_call.1} parent=1 // pred_check_branch
      %92 = sbr.rel (0) target = $region25
    $region24: #{tpu_custom_call.1} parent=1 // pred_region
      %94 = dma.done [#allocation4], 128
    $region25: #{tpu_custom_call.1} parent=1 // pred_fallthru
      _
    %95 = vsyncpa [#allocation3], 1
    %96 = vsyncpa [#allocation6], 1
    %97 = vsyncpa [#allocation4], 1

</llo_original>
